<compile_context>
chip_gen: v7x
topology: tpu7x:2x2x1
jax: 0.10.0
libtpu: 0.0.40
codegen_flags: <defaults>
</compile_context>

<pallas_src>
import jax
import jax.numpy as jnp
from jax.experimental import pallas as pl
from jax.experimental.pallas import tpu as pltpu


def _mlp_kernel(x_ref, w_ref, b_ref, o_ref, acc_ref):
    """One (batch-tile, d-tile) grid step of relu(x @ W^T + b), out_features == 1.

    x_ref  : (TB, TD) feature tile (VMEM, streamed / double-buffered)
    w_ref  : (1, TD)  weight tile  (VMEM, constant over the batch axis -> resident)
    b_ref  : (1,)     bias scalar  (SMEM)
    o_ref  : (TB, 1)  output tile  (constant over the D axis -> resident)
    acc_ref: (TB, 1)  f32 scratch accumulator
    """
    k = pl.program_id(1)

    @pl.when(k == 0)
    def _():
        acc_ref[...] = jnp.zeros_like(acc_ref)

    # out_features == 1 -> elementwise multiply (VPU) + lane reduction (XLU).
    # A 1-column MXU matmul would use <1% of the MXU and this op is HBM-bound
    # anyway.  Accumulate in f32 regardless of the input dtype (bf16-safe).
    x = x_ref[...].astype(jnp.float32)
    w = w_ref[...].astype(jnp.float32)
    acc_ref[...] += jnp.sum(x * w, axis=-1, keepdims=True)

    @pl.when(k == pl.num_programs(1) - 1)
    def _():
        y = acc_ref[...] + b_ref[0]                      # scalar bias from SMEM
        o_ref[...] = jnp.maximum(y, 0.0).astype(o_ref.dtype)


def _choose_tiles(B, D, itemsize):
    """Pick (TB, TD) so one double-buffered feature tile stays well under VMEM.

    ~4 MiB per feature buffer (8 MiB double-buffered) is safe on every TPU
    generation (v7x: 64 MiB physical / 32 MiB scoped default) while still
    large enough to amortize the ~0.35 us per-grid-step overhead.
    """
    per_buf = 4 * 1024 * 1024
    if D * itemsize * 8 <= per_buf:
        td = D                                           # whole reduction in one step
    else:
        td = 128                                         # tile the reduction axis
        while td * 2 <= D and (td * 2) * 8 * itemsize <= per_buf:
            td *= 2
    cap_rows = max(8, (per_buf // (td * itemsize)) // 8 * 8)
    tb = B if B <= cap_rows else min(1024, cap_rows)
    return tb, td


def mlp_forward(feature, weight, bias, tb=None, td=None):
    """relu(feature @ weight.T + bias); feature (B, D), weight (1, D), bias (1,)."""
    B, D = feature.shape
    assert weight.shape == (1, D)
    bias = bias.reshape((1,)).astype(jnp.float32)

    auto_tb, auto_td = _choose_tiles(B, D, feature.dtype.itemsize)
    tb = auto_tb if tb is None else tb
    td = auto_td if td is None else td

    # Zero-pad the reduction axis so TD divides it exactly (zeros do not change
    # the dot product).  Ragged batch tiles are fine as-is: out-of-bounds rows
    # are dropped on store and every row is independent.
    if D % td != 0:
        pad = td - D % td
        feature = jnp.pad(feature, ((0, 0), (0, pad)))
        weight = jnp.pad(weight, ((0, 0), (0, pad)))
        D += pad

    nb = pl.cdiv(B, tb)
    nd = D // td

    return pl.pallas_call(
        _mlp_kernel,
        out_shape=jax.ShapeDtypeStruct((B, 1), feature.dtype),
        grid_spec=pltpu.PrefetchScalarGridSpec(
            num_scalar_prefetch=0,
            grid=(nb, nd),                               # reduction axis last
            in_specs=[
                # Feature tiles stream through VMEM (auto double-buffered).
                pl.BlockSpec((tb, td), lambda i, k: (i, k)),
                # Weight slice: index constant over the batch axis -> no re-DMA per tile.
                pl.BlockSpec((1, td), lambda i, k: (0, k)),
                # Bias: single scalar in SMEM (no padded VMEM tile / per-step DMA).
                pl.BlockSpec(memory_space=pltpu.MemorySpace.SMEM),
            ],
            # Output block constant over k -> resident while the D reduction runs.
            # TODO(synk): for very small D a lane-dense (1, TB) output store would
            # further cut masked-store pressure; kept (TB, 1) for layout robustness.
            out_specs=pl.BlockSpec((tb, 1), lambda i, k: (i, 0)),
            scratch_shapes=[pltpu.VMEM((tb, 1), jnp.float32)],
        ),
        compiler_params=pltpu.CompilerParams(
            # Batch tiles are independent -> shard across TensorCores (2 TCs on v7x);
            # the D axis carries the accumulator -> arbitrary.
            dimension_semantics=("parallel", "arbitrary"),
        ),
    )(feature, weight, bias)


if __name__ == "__main__":
    key = jax.random.PRNGKey(0)
    k_feat, k_bias, k_feat2 = jax.random.split(key, 3)

    def ref(feature, weight, bias):
        return jnp.maximum(feature @ weight.T + bias, 0.0)

    # Case 1: module-sized inputs (batch=8, dim=32) mirroring MLP.init_weight():
    #   nn.init.uniform_(weight, 0.1, 0.1) -> all elements exactly 0.1
    #   nn.init.uniform_(bias, a=0, b=0.2) -> uniform in [0, 0.2)
    B, D = 8, 32
    weight = jnp.full((1, D), 0.1, dtype=jnp.float32)
    bias = jax.random.uniform(k_bias, (1,), minval=0.0, maxval=0.2, dtype=jnp.float32)
    feature = jax.random.normal(k_feat, (B, D), dtype=jnp.float32)

    out = jax.block_until_ready(mlp_forward(feature, weight, bias))
    assert out.shape == (B, 1)
    assert jnp.allclose(out, ref(feature, weight, bias), atol=1e-5)

    # Case 2: force tiny tiles to exercise the batch grid (incl. a ragged last
    # tile) and the D-reduction accumulator path.
    B2, D2 = 20, 256
    weight2 = jnp.full((1, D2), 0.1, dtype=jnp.float32)
    feature2 = jax.random.normal(k_feat2, (B2, D2), dtype=jnp.float32)
    out2 = jax.block_until_ready(mlp_forward(feature2, weight2, bias, tb=8, td=128))
    assert out2.shape == (B2, 1)
    assert jnp.allclose(out2, ref(feature2, weight2, bias), atol=1e-4)

    print("KERNEL_OK")
</pallas_src>

<mosaic_0001>
module attributes {stable_mosaic.version = 11 : i64} {
  func.func @_mlp_kernel(%arg0: i32, %arg1: i32, %arg2: memref<8x32xf32, #tpu.memory_space<vmem>>, %arg3: memref<1x32xf32, #tpu.memory_space<vmem>>, %arg4: memref<1xf32, #tpu.memory_space<smem>>, %arg5: memref<8x1xf32, #tpu.memory_space<vmem>>, %arg6: memref<8x1xf32, #tpu.memory_space<vmem>>) attributes {dimension_semantics = [#tpu.dimension_semantics<parallel>, #tpu.dimension_semantics<arbitrary>], iteration_bounds = array<i64: 1, 1>, scalar_prefetch = 0 : i64, scratch_operands = 1 : i64, tpu.core_type = #tpu.core_type<tc>, window_params = [{transform_indices = @transform_0, window_bounds = array<i64: 8, 32>}, {transform_indices = @transform_1, window_bounds = array<i64: 1, 32>}, {transform_indices = @transform_2, window_bounds = array<i64: 1>}, {transform_indices = @transform_3, window_bounds = array<i64: 8, 1>}]} {
    %c0_i32 = arith.constant 0 : i32
    %0 = arith.cmpi eq, %arg1, %c0_i32 : i32
    %1 = arith.extui %0 : i1 to i32
    %c0_i32_0 = arith.constant 0 : i32
    %2 = arith.cmpi ne, %1, %c0_i32_0 : i32
    scf.if %2 {
      %cst_10 = arith.constant 0.000000e+00 : f32
      %15 = vector.broadcast %cst_10 : f32 to vector<8x1xf32>
      %c0_11 = arith.constant 0 : index
      %c0_12 = arith.constant 0 : index
      %16 = vector.load %arg6[%c0_11, %c0_12] : memref<8x1xf32, #tpu.memory_space<vmem>>, vector<8x1xf32>
      tpu.vector_store %arg6[%c0_11, %c0_12], %15 {strides = array<i32>} : memref<8x1xf32, #tpu.memory_space<vmem>>, vector<8x1xf32>,
    } else {
    }
    %c0 = arith.constant 0 : index
    %c0_1 = arith.constant 0 : index
    %3 = vector.load %arg2[%c0, %c0_1] : memref<8x32xf32, #tpu.memory_space<vmem>>, vector<8x32xf32>
    %c0_2 = arith.constant 0 : index
    %c0_3 = arith.constant 0 : index
    %4 = vector.load %arg3[%c0_2, %c0_3] : memref<1x32xf32, #tpu.memory_space<vmem>>, vector<1x32xf32>
    %c0_4 = arith.constant 0 : index
    %c0_5 = arith.constant 0 : index
    %5 = vector.load %arg6[%c0_4, %c0_5] : memref<8x1xf32, #tpu.memory_space<vmem>>, vector<8x1xf32>
    %6 = vector.broadcast %4 : vector<1x32xf32> to vector<8x32xf32>
    %7 = arith.mulf %3, %6 : vector<8x32xf32>
    %cst = arith.constant dense<0.000000e+00> : vector<8xf32>
    %8 = vector.multi_reduction <add>, %7, %cst [1] : vector<8x32xf32> to vector<8xf32>
    %9 = vector.shape_cast %8 : vector<8xf32> to vector<8x1xf32>
    %10 = arith.addf %5, %9 : vector<8x1xf32>
    %c0_6 = arith.constant 0 : index
    %c0_7 = arith.constant 0 : index
    %11 = vector.load %arg6[%c0_6, %c0_7] : memref<8x1xf32, #tpu.memory_space<vmem>>, vector<8x1xf32>
    tpu.vector_store %arg6[%c0_6, %c0_7], %10 {strides = array<i32>} : memref<8x1xf32, #tpu.memory_space<vmem>>, vector<8x1xf32>,
    %c0_i32_8 = arith.constant 0 : i32
    %12 = arith.cmpi eq, %arg1, %c0_i32_8 : i32
    %13 = arith.extui %12 : i1 to i32
    %c0_i32_9 = arith.constant 0 : i32
    %14 = arith.cmpi ne, %13, %c0_i32_9 : i32
    scf.if %14 {
      %c0_10 = arith.constant 0 : index
      %c0_11 = arith.constant 0 : index
      %15 = vector.load %arg6[%c0_10, %c0_11] : memref<8x1xf32, #tpu.memory_space<vmem>>, vector<8x1xf32>
      %c0_12 = arith.constant 0 : index
      %16 = memref.load %arg4[%c0_12] : memref<1xf32, #tpu.memory_space<smem>>
      %17 = vector.broadcast %16 : f32 to vector<8x1xf32>
      %18 = arith.addf %15, %17 : vector<8x1xf32>
      %cst_13 = arith.constant 0.000000e+00 : f32
      %19 = vector.broadcast %cst_13 : f32 to vector<8x1xf32>
      %20 = arith.maximumf %18, %19 : vector<8x1xf32>
      %c0_14 = arith.constant 0 : index
      %c0_15 = arith.constant 0 : index
      %21 = vector.load %arg5[%c0_14, %c0_15] : memref<8x1xf32, #tpu.memory_space<vmem>>, vector<8x1xf32>
      tpu.vector_store %arg5[%c0_14, %c0_15], %20 {strides = array<i32>} : memref<8x1xf32, #tpu.memory_space<vmem>>, vector<8x1xf32>,
    } else {
    }
    return
  }
  func.func @transform_0(%arg0: i32, %arg1: i32) -> (i32, i32) {
    %c0_i32 = arith.constant 0 : i32
    return %arg0, %arg1 : i32, i32
  }
  func.func @transform_1(%arg0: i32, %arg1: i32) -> (i32, i32) {
    %c0_i32 = arith.constant 0 : i32
    %c0_i32_0 = arith.constant 0 : i32
    return %c0_i32, %arg1 : i32, i32
  }
  func.func @transform_2(%arg0: i32, %arg1: i32) -> i32 {
    %c0_i32 = arith.constant 0 : i32
    %c0_i32_0 = arith.constant 0 : i32
    return %c0_i32 : i32
  }
  func.func @transform_3(%arg0: i32, %arg1: i32) -> (i32, i32) {
    %c0_i32 = arith.constant 0 : i32
    %c0_i32_0 = arith.constant 0 : i32
    return %arg0, %c0_i32 : i32, i32
  }
}

</mosaic_0001>

<llo_original>
// kernel: tpu_custom_call.1
$region0: #{tpu_custom_call.1}
  #allocation0 [shape = 'u32[]', space=smem, size = 0x4, offset = 0x4, fixed_abs, tag = 'smem constant byte address 0x4 - core index']
  #allocation1 [shape = 'u32[144,128]{1,0:T(1,128)}', space=vmem, size = 0x12000, scoped, tag = 'internal scratch']
  #allocation2 [shape = 'f32[8,1]{1,0:T(8,128)}', space=vmem, size = 0x1000, scoped, tag = 'scratch operand']
  #allocation3 [shape = 'f32[1]{0:T(128)S(6)}', space=smem, size = 0x200, scoped, tag = 'scoped memory for tpu_custom_call.1']
  %s0 = inlined_call_operand.hbm [shape: f32[8,32], index: 0, kind: input, shape index: {}]
  %s1 = inlined_call_operand.vmem [shape: f32[1,32], index: 1, kind: input, shape index: {}]
  %s2 = inlined_call_operand.<no memory space> [shape: f32[1], index: 2, kind: input, shape index: {}]
  %s3 = inlined_call_operand.vmem [shape: f32[8,1], index: 3, kind: output, shape index: {}]
  %s4 = sld [smem:[#allocation0]]
  $region34: #{tpu_custom_call.1} parent=0
    _
  %s6 = ssub.s32 1, %s4
  %s7 = scalar_select 0, %s6, %s4
  %8 = sst [smem:[#allocation3]] %s2
  $region1: #{tpu_custom_call.1} parent=0
    #allocation4 [shape = 'u8[4096]{0}', space=vmem, size = 0x1000, scoped, tag = 'input window, operand 0, single buffered']
    #allocation5 [shape = 's32[1]{0}', space=sflag, size = 0x4, scoped, tag = 'scoped memory for tpu_custom_call.1']
    %9 = vsyncpa [#allocation5], 0
    // Predicated region
    $region2: #{tpu_custom_call.1} parent=1 // pred_check
      _
    $region3: #{tpu_custom_call.1} parent=1 // pred_check_branch
      %11 = sbr.rel (0) target = $region5
    $region4: #{tpu_custom_call.1} parent=1 // pred_region
      %s13 = ssub.s32 128, 128
      %14 = vsyncadd [#allocation5], %s13
      %s16 = sshll.u32 [#allocation4], 4
      %s17 = int_to_ptr.vmem [resolvable:$true] %s16
      %19 = dma.hbm_to_vmem [thread:$0]  %s0, 128, %s17, [#allocation5]
    $region5: #{tpu_custom_call.1} parent=1 // pred_fallthru
      _
    // Predicated region
    $region6: #{tpu_custom_call.1} parent=1 // pred_check
      _
    $region7: #{tpu_custom_call.1} parent=1 // pred_check_branch
      %21 = sbr.rel (0) target = $region9
    $region8: #{tpu_custom_call.1} parent=1 // pred_region
      _
    $region9: #{tpu_custom_call.1} parent=1 // pred_fallthru
      _
    // Predicated region
    $region10: #{tpu_custom_call.1} parent=1 // pred_check
      _
    $region11: #{tpu_custom_call.1} parent=1 // pred_check_branch
      %23 = sbr.rel (0) target = $region13
    $region12: #{tpu_custom_call.1} parent=1 // pred_region
      _
    $region13: #{tpu_custom_call.1} parent=1 // pred_fallthru
      _
    // Predicated region
    $region14: #{tpu_custom_call.1} parent=1 // pred_check
      _
    $region15: #{tpu_custom_call.1} parent=1 // pred_check_branch
      %25 = sbr.rel (0) target = $region17
    $region16: #{tpu_custom_call.1} parent=1 // pred_region
      %26 = dma.done [#allocation5], 128
    $region17: #{tpu_custom_call.1} parent=1 // pred_fallthru
      _
    %p27 = scmp.eq.s32.totalorder 0, 0
    // Predicated region
    $region18: #{tpu_custom_call.1} parent=1 // pred_check
      %p28 = pneg %p27
    $region19: #{tpu_custom_call.1} parent=1 // pred_check_branch
      %30 = sbr.rel (%p28) target = $region21
    $region20: #{tpu_custom_call.1} parent=1 // pred_region
      %vm31 = vcmask 7168
      %32 = vst.msk [vmem:[#allocation2] sm:$0xff] %vm31, 0.0
    $region21: #{tpu_custom_call.1} parent=1 // pred_fallthru
      _
    %v33 = vld [vmem:[#allocation4] sm:$0xff]
    %v34 = vld [vmem:[%s1] sm:$0x1]
    %v35 = vld [vmem:[#allocation2] sm:$0xff]
    %v37 = vlaneseq
    %v38 = vshrl.u32 %v37, 7
    %v39 = vsub.s32 0, %v38
    %v40 = vrot.slane %v34, %v39
    %v42 = vmul.f32 %v33, %v40
    %vm43 = vcmask 261120
    %v44 = vsel %vm43, %v42, 0.0
    %45 = vadd.xlane.f32.xlu0 %v44
    %v46 = vpop.xlane.xlu0 %45
    %v47 = vadd.f32 %v35, %v46
    %vm48 = vcmask 7168
    %49 = vst.msk [vmem:[#allocation2] sm:$0xff] %vm48, %v47
    // Predicated region
    $region22: #{tpu_custom_call.1} parent=1 // pred_check
      %p50 = pneg %p27
    $region23: #{tpu_custom_call.1} parent=1 // pred_check_branch
      %52 = sbr.rel (%p50) target = $region25
    $region24: #{tpu_custom_call.1} parent=1 // pred_region
      %v53 = vld [vmem:[#allocation2] sm:$0xff]
      %s54 = sld [smem:[#allocation3]]
      %v55 = vstv %s54
      %v56 = vadd.f32 %v53, %v55
      %v57 = vmax.f32 %v56, 0.0
      %58 = vst.msk [vmem:[%s3] sm:$0xff] %vm48, %v57
    $region25: #{tpu_custom_call.1} parent=1 // pred_fallthru
      _
    // Predicated region
    $region26: #{tpu_custom_call.1} parent=1 // pred_check
      _
    $region27: #{tpu_custom_call.1} parent=1 // pred_check_branch
      %60 = sbr.rel (0) target = $region29
    $region28: #{tpu_custom_call.1} parent=1 // pred_region
      _
    $region29: #{tpu_custom_call.1} parent=1 // pred_fallthru
      _
    // Predicated region
    $region30: #{tpu_custom_call.1} parent=1 // pred_check
      _
    $region31: #{tpu_custom_call.1} parent=1 // pred_check_branch
      %62 = sbr.rel (0) target = $region33
    $region32: #{tpu_custom_call.1} parent=1 // pred_region
      _
    $region33: #{tpu_custom_call.1} parent=1 // pred_fallthru
      _
    %63 = vsyncpa [#allocation5], 1

</llo_original>
